<compile_context>
chip_gen: v5e
topology: v5e:2x2
jax: 0.10.0
libtpu: 0.0.40
codegen_flags: <defaults>
</compile_context>

<pallas_src>
import jax
import jax.numpy as jnp
from jax.experimental import pallas as pl
from jax.experimental.pallas import tpu as pltpu

N_SLOTS = 2
N_TYPES = 2


def _critic_kernel(p_ref, at_ref, aa_ref, da_ref, out_ref):
    # p_ref  : SMEM (N_TYPES, N_SLOTS*N_SLOTS)  -- 8 scalars
    # at_ref : VMEM (N_TYPES, TB)               -- attacker type, batch on lanes
    # aa_ref : VMEM (N_SLOTS, TB)               -- attacker action
    # da_ref : VMEM (N_SLOTS, TB)               -- defender action
    # out_ref: VMEM (1, TB)
    at = at_ref[...]
    aa = aa_ref[...]
    da = da_ref[...]

    acc = jnp.zeros(out_ref.shape, jnp.float32)
    # out[b] = sum_{i,j} aa[i,b] * ( sum_t p[t, i*S+j] * at[t,b] ) * da[j,b]
    # Fully unrolled over the tiny (types x slots x slots) index space;
    # every operand row is a full-lane (1, TB) vector -> pure VPU work.
    for i in range(N_SLOTS):
        for j in range(N_SLOTS):
            k = i * N_SLOTS + j
            y = p_ref[0, k] * at[0:1, :]
            for t in range(1, N_TYPES):
                y = y + p_ref[t, k] * at[t:t + 1, :]
            acc = acc + aa[i:i + 1, :] * y * da[j:j + 1, :]

    out_ref[...] = acc


def critic_forward(payoff, prior, r, atk_type, atk_prob, atk_ac, dfd_prob, dfd_ac,
                   *, batch_tile=512):
    """JAX/Pallas equivalent of Critic(payoff).forward(...). Returns (B, 1) float32.

    NOTE: for very small batches the fixed pallas_call launch overhead dominates;
    a fused XLA einsum would be cheaper there.  The kernel targets the large-B,
    HBM-bandwidth-bound regime.
    """
    del prior, r, atk_prob, dfd_prob  # unused by the original forward

    b = atk_type.shape[0]
    p_flat = jnp.reshape(jnp.asarray(payoff, jnp.float32),
                         (N_TYPES, N_SLOTS * N_SLOTS))

    # Lane-dense transpose: batch on the lane (last) axis.
    at = jnp.transpose(atk_type.astype(jnp.float32))  # (N_TYPES, B)
    aa = jnp.transpose(atk_ac.astype(jnp.float32))    # (N_SLOTS, B)
    da = jnp.transpose(dfd_ac.astype(jnp.float32))    # (N_SLOTS, B)

    # Choose a batch tile that is a multiple of 128 lanes; shrink it for small B.
    tb = int(batch_tile)
    tb = max(128, (tb // 128) * 128)
    if b <= tb:
        tb = max(128, ((b + 127) // 128) * 128)

    # Zero-pad the batch to a multiple of the tile (zeros contribute 0 to the
    # bilinear form, so padded lanes are harmless and sliced away below).
    bp = ((b + tb - 1) // tb) * tb
    pad = bp - b
    if pad:
        at = jnp.pad(at, ((0, 0), (0, pad)))
        aa = jnp.pad(aa, ((0, 0), (0, pad)))
        da = jnp.pad(da, ((0, 0), (0, pad)))

    grid = (bp // tb,)

    out = pl.pallas_call(
        _critic_kernel,
        out_shape=jax.ShapeDtypeStruct((1, bp), jnp.float32),
        grid=grid,
        in_specs=[
            # Tiny payoff table lives in SMEM; read as broadcast scalars.
            pl.BlockSpec(memory_space=pltpu.MemorySpace.SMEM),
            pl.BlockSpec((N_TYPES, tb), lambda i: (0, i)),
            pl.BlockSpec((N_SLOTS, tb), lambda i: (0, i)),
            pl.BlockSpec((N_SLOTS, tb), lambda i: (0, i)),
        ],
        out_specs=pl.BlockSpec((1, tb), lambda i: (0, i)),
        compiler_params=pltpu.CompilerParams(
            dimension_semantics=("parallel",),
            vmem_limit_bytes=64 << 20,
        ),
    )(p_flat, at, aa, da)

    # (1, bp) -> (B, 1)
    return jnp.transpose(out[:, :b])


if __name__ == "__main__":
    key = jax.random.PRNGKey(0)
    B = 8
    k1, k2, k3, k4, k5, k6, k7, k8 = jax.random.split(key, 8)

    # Deterministic synthetic "environment payoff" and batch of transitions.
    payoff = jax.random.normal(k1, (N_TYPES, N_SLOTS, N_SLOTS), dtype=jnp.float32)
    prior = jax.random.uniform(k2, (B, N_TYPES), dtype=jnp.float32)
    r = jax.random.normal(k3, (B, 1), dtype=jnp.float32)
    atk_type = jax.nn.one_hot(
        jax.random.randint(k4, (B,), 0, N_TYPES), N_TYPES, dtype=jnp.float32)
    atk_prob = jax.nn.softmax(jax.random.normal(k5, (B, N_SLOTS)), axis=-1)
    atk_ac = jax.nn.one_hot(
        jax.random.randint(k6, (B,), 0, N_SLOTS), N_SLOTS, dtype=jnp.float32)
    dfd_prob = jax.nn.softmax(jax.random.normal(k7, (B, N_SLOTS)), axis=-1)
    dfd_ac = jax.nn.one_hot(
        jax.random.randint(k8, (B,), 0, N_SLOTS), N_SLOTS, dtype=jnp.float32)

    out = critic_forward(payoff, prior, r, atk_type, atk_prob, atk_ac,
                         dfd_prob, dfd_ac)
    out = jax.block_until_ready(out)

    # Pure-JAX reference of the PyTorch forward for a correctness check.
    ref = jnp.einsum('bt,tij,bi,bj->b', atk_type, payoff, atk_ac, dfd_ac)[:, None]
    assert out.shape == (B, 1), out.shape
    assert jnp.allclose(out, ref, atol=1e-5), (out, ref)

    print("KERNEL_OK")
</pallas_src>

<mosaic_0001>
module attributes {stable_mosaic.version = 11 : i64} {
  func.func @_critic_kernel(%arg0: i32, %arg1: memref<2x4xf32, #tpu.memory_space<smem>>, %arg2: memref<2x128xf32, #tpu.memory_space<vmem>>, %arg3: memref<2x128xf32, #tpu.memory_space<vmem>>, %arg4: memref<2x128xf32, #tpu.memory_space<vmem>>, %arg5: memref<1x128xf32, #tpu.memory_space<vmem>>) attributes {dimension_semantics = [#tpu.dimension_semantics<parallel>], iteration_bounds = array<i64: 1>, scalar_prefetch = 0 : i64, scratch_operands = 0 : i64, tpu.core_type = #tpu.core_type<tc>, window_params = [{transform_indices = @transform_0, window_bounds = array<i64: 2, 4>}, {transform_indices = @transform_1, window_bounds = array<i64: 2, 128>}, {transform_indices = @transform_2, window_bounds = array<i64: 2, 128>}, {transform_indices = @transform_3, window_bounds = array<i64: 2, 128>}, {transform_indices = @transform_4, window_bounds = array<i64: 1, 128>}]} {
    %c0 = arith.constant 0 : index
    %c0_0 = arith.constant 0 : index
    %0 = vector.load %arg2[%c0, %c0_0] : memref<2x128xf32, #tpu.memory_space<vmem>>, vector<2x128xf32>
    %c0_1 = arith.constant 0 : index
    %c0_2 = arith.constant 0 : index
    %1 = vector.load %arg3[%c0_1, %c0_2] : memref<2x128xf32, #tpu.memory_space<vmem>>, vector<2x128xf32>
    %c0_3 = arith.constant 0 : index
    %c0_4 = arith.constant 0 : index
    %2 = vector.load %arg4[%c0_3, %c0_4] : memref<2x128xf32, #tpu.memory_space<vmem>>, vector<2x128xf32>
    %cst = arith.constant 0.000000e+00 : f32
    %3 = vector.broadcast %cst : f32 to vector<1x128xf32>
    %c0_5 = arith.constant 0 : index
    %c0_6 = arith.constant 0 : index
    %4 = memref.load %arg1[%c0_5, %c0_6] : memref<2x4xf32, #tpu.memory_space<smem>>
    %5 = vector.extract_strided_slice %0 {offsets = [0, 0], sizes = [1, 128], strides = [1, 1]} : vector<2x128xf32> to vector<1x128xf32>
    %6 = vector.broadcast %4 : f32 to vector<1x128xf32>
    %7 = arith.mulf %6, %5 : vector<1x128xf32>
    %c1 = arith.constant 1 : index
    %c0_7 = arith.constant 0 : index
    %8 = memref.load %arg1[%c1, %c0_7] : memref<2x4xf32, #tpu.memory_space<smem>>
    %9 = vector.extract_strided_slice %0 {offsets = [1, 0], sizes = [1, 128], strides = [1, 1]} : vector<2x128xf32> to vector<1x128xf32>
    %10 = vector.broadcast %8 : f32 to vector<1x128xf32>
    %11 = arith.mulf %10, %9 : vector<1x128xf32>
    %12 = arith.addf %7, %11 : vector<1x128xf32>
    %13 = vector.extract_strided_slice %1 {offsets = [0, 0], sizes = [1, 128], strides = [1, 1]} : vector<2x128xf32> to vector<1x128xf32>
    %14 = arith.mulf %13, %12 : vector<1x128xf32>
    %15 = vector.extract_strided_slice %2 {offsets = [0, 0], sizes = [1, 128], strides = [1, 1]} : vector<2x128xf32> to vector<1x128xf32>
    %16 = arith.mulf %14, %15 : vector<1x128xf32>
    %17 = arith.addf %3, %16 : vector<1x128xf32>
    %c0_8 = arith.constant 0 : index
    %c1_9 = arith.constant 1 : index
    %18 = memref.load %arg1[%c0_8, %c1_9] : memref<2x4xf32, #tpu.memory_space<smem>>
    %19 = vector.extract_strided_slice %0 {offsets = [0, 0], sizes = [1, 128], strides = [1, 1]} : vector<2x128xf32> to vector<1x128xf32>
    %20 = vector.broadcast %18 : f32 to vector<1x128xf32>
    %21 = arith.mulf %20, %19 : vector<1x128xf32>
    %c1_10 = arith.constant 1 : index
    %c1_11 = arith.constant 1 : index
    %22 = memref.load %arg1[%c1_10, %c1_11] : memref<2x4xf32, #tpu.memory_space<smem>>
    %23 = vector.extract_strided_slice %0 {offsets = [1, 0], sizes = [1, 128], strides = [1, 1]} : vector<2x128xf32> to vector<1x128xf32>
    %24 = vector.broadcast %22 : f32 to vector<1x128xf32>
    %25 = arith.mulf %24, %23 : vector<1x128xf32>
    %26 = arith.addf %21, %25 : vector<1x128xf32>
    %27 = vector.extract_strided_slice %1 {offsets = [0, 0], sizes = [1, 128], strides = [1, 1]} : vector<2x128xf32> to vector<1x128xf32>
    %28 = arith.mulf %27, %26 : vector<1x128xf32>
    %29 = vector.extract_strided_slice %2 {offsets = [1, 0], sizes = [1, 128], strides = [1, 1]} : vector<2x128xf32> to vector<1x128xf32>
    %30 = arith.mulf %28, %29 : vector<1x128xf32>
    %31 = arith.addf %17, %30 : vector<1x128xf32>
    %c0_12 = arith.constant 0 : index
    %c2 = arith.constant 2 : index
    %32 = memref.load %arg1[%c0_12, %c2] : memref<2x4xf32, #tpu.memory_space<smem>>
    %33 = vector.extract_strided_slice %0 {offsets = [0, 0], sizes = [1, 128], strides = [1, 1]} : vector<2x128xf32> to vector<1x128xf32>
    %34 = vector.broadcast %32 : f32 to vector<1x128xf32>
    %35 = arith.mulf %34, %33 : vector<1x128xf32>
    %c1_13 = arith.constant 1 : index
    %c2_14 = arith.constant 2 : index
    %36 = memref.load %arg1[%c1_13, %c2_14] : memref<2x4xf32, #tpu.memory_space<smem>>
    %37 = vector.extract_strided_slice %0 {offsets = [1, 0], sizes = [1, 128], strides = [1, 1]} : vector<2x128xf32> to vector<1x128xf32>
    %38 = vector.broadcast %36 : f32 to vector<1x128xf32>
    %39 = arith.mulf %38, %37 : vector<1x128xf32>
    %40 = arith.addf %35, %39 : vector<1x128xf32>
    %41 = vector.extract_strided_slice %1 {offsets = [1, 0], sizes = [1, 128], strides = [1, 1]} : vector<2x128xf32> to vector<1x128xf32>
    %42 = arith.mulf %41, %40 : vector<1x128xf32>
    %43 = vector.extract_strided_slice %2 {offsets = [0, 0], sizes = [1, 128], strides = [1, 1]} : vector<2x128xf32> to vector<1x128xf32>
    %44 = arith.mulf %42, %43 : vector<1x128xf32>
    %45 = arith.addf %31, %44 : vector<1x128xf32>
    %c0_15 = arith.constant 0 : index
    %c3 = arith.constant 3 : index
    %46 = memref.load %arg1[%c0_15, %c3] : memref<2x4xf32, #tpu.memory_space<smem>>
    %47 = vector.extract_strided_slice %0 {offsets = [0, 0], sizes = [1, 128], strides = [1, 1]} : vector<2x128xf32> to vector<1x128xf32>
    %48 = vector.broadcast %46 : f32 to vector<1x128xf32>
    %49 = arith.mulf %48, %47 : vector<1x128xf32>
    %c1_16 = arith.constant 1 : index
    %c3_17 = arith.constant 3 : index
    %50 = memref.load %arg1[%c1_16, %c3_17] : memref<2x4xf32, #tpu.memory_space<smem>>
    %51 = vector.extract_strided_slice %0 {offsets = [1, 0], sizes = [1, 128], strides = [1, 1]} : vector<2x128xf32> to vector<1x128xf32>
    %52 = vector.broadcast %50 : f32 to vector<1x128xf32>
    %53 = arith.mulf %52, %51 : vector<1x128xf32>
    %54 = arith.addf %49, %53 : vector<1x128xf32>
    %55 = vector.extract_strided_slice %1 {offsets = [1, 0], sizes = [1, 128], strides = [1, 1]} : vector<2x128xf32> to vector<1x128xf32>
    %56 = arith.mulf %55, %54 : vector<1x128xf32>
    %57 = vector.extract_strided_slice %2 {offsets = [1, 0], sizes = [1, 128], strides = [1, 1]} : vector<2x128xf32> to vector<1x128xf32>
    %58 = arith.mulf %56, %57 : vector<1x128xf32>
    %59 = arith.addf %45, %58 : vector<1x128xf32>
    %c0_18 = arith.constant 0 : index
    %c0_19 = arith.constant 0 : index
    %60 = vector.load %arg5[%c0_18, %c0_19] : memref<1x128xf32, #tpu.memory_space<vmem>>, vector<1x128xf32>
    tpu.vector_store %arg5[%c0_18, %c0_19], %59 {strides = array<i32>} : memref<1x128xf32, #tpu.memory_space<vmem>>, vector<1x128xf32>,
    return
  }
  func.func @transform_0(%arg0: i32) -> (i32, i32) {
    %c0_i32 = arith.constant 0 : i32
    %c0_i32_0 = arith.constant 0 : i32
    %c0_i32_1 = arith.constant 0 : i32
    return %c0_i32, %c0_i32_0 : i32, i32
  }
  func.func @transform_1(%arg0: i32) -> (i32, i32) {
    %c0_i32 = arith.constant 0 : i32
    %c0_i32_0 = arith.constant 0 : i32
    return %c0_i32, %arg0 : i32, i32
  }
  func.func @transform_2(%arg0: i32) -> (i32, i32) {
    %c0_i32 = arith.constant 0 : i32
    %c0_i32_0 = arith.constant 0 : i32
    return %c0_i32, %arg0 : i32, i32
  }
  func.func @transform_3(%arg0: i32) -> (i32, i32) {
    %c0_i32 = arith.constant 0 : i32
    %c0_i32_0 = arith.constant 0 : i32
    return %c0_i32, %arg0 : i32, i32
  }
  func.func @transform_4(%arg0: i32) -> (i32, i32) {
    %c0_i32 = arith.constant 0 : i32
    %c0_i32_0 = arith.constant 0 : i32
    return %c0_i32, %arg0 : i32, i32
  }
}

</mosaic_0001>

<llo_original>
// kernel: tpu_custom_call.1
$region0: #{tpu_custom_call.1}
  #allocation0 [shape = 'u32[]', space=smem, size = 0x4, offset = 0x4, fixed_abs, tag = 'smem constant byte address 0x4 - core index']
  #allocation1 [shape = 'u32[72,128]{1,0:T(1,128)}', space=vmem, size = 0x9000, scoped, tag = 'internal scratch']
  %s0 = inlined_call_operand.hbm [shape: f32[2,4], index: 0, kind: input, shape index: {}]
  %s1 = inlined_call_operand.hbm [shape: f32[2,128], index: 1, kind: input, shape index: {}]
  %s2 = inlined_call_operand.hbm [shape: f32[2,128], index: 2, kind: input, shape index: {}]
  %s3 = inlined_call_operand.vmem [shape: f32[2,128], index: 3, kind: input, shape index: {}]
  %s4 = inlined_call_operand.hbm [shape: f32[1,128], index: 4, kind: output, shape index: {}]
  %s5 = sld [smem:[#allocation0]]
  $region38: #{tpu_custom_call.1} parent=0
    _
  %s7 = ssub.s32 1, %s5
  %s8 = scalar_select 0, %s7, %s5
  $region1: #{tpu_custom_call.1} parent=0
    #allocation2 [shape = 'u8[1024]{0}', space=smem, size = 0x400, scoped, tag = 'input window, operand 0, single buffered']
    #allocation3 [shape = 's32[1]{0}', space=sflag, size = 0x4, scoped, tag = 'scoped memory for tpu_custom_call.1']
    #allocation4 [shape = 's32[1]{0}', space=sflag, size = 0x4, scoped, tag = 'scoped memory for tpu_custom_call.1']
    #allocation5 [shape = 's32[1]{0}', space=sflag, size = 0x4, scoped, tag = 'scoped memory for tpu_custom_call.1']
    #allocation6 [shape = 'u8[1024]{0}', space=vmem, size = 0x400, scoped, tag = 'input window, operand 1, single buffered']
    #allocation7 [shape = 'u8[1024]{0}', space=vmem, size = 0x400, scoped, tag = 'input window, operand 2, single buffered']
    #allocation8 [shape = 's32[1]{0}', space=sflag, size = 0x4, scoped, tag = 'scoped memory for tpu_custom_call.1']
    #allocation9 [shape = 'u8[512]{0}', space=vmem, size = 0x400, scoped, tag = 'output window, operand 0, single buffered']
    %9 = vsyncpa [#allocation5], 0
    %10 = vsyncpa [#allocation3], 0
    %11 = vsyncpa [#allocation8], 0
    %12 = vsyncpa [#allocation4], 0
    // Predicated region
    $region2: #{tpu_custom_call.1} parent=1 // pred_check
      _
    $region3: #{tpu_custom_call.1} parent=1 // pred_check_branch
      %14 = sbr.rel (0) target = $region5
    $region4: #{tpu_custom_call.1} parent=1 // pred_region
      %16 = vsyncadd [#allocation5], 0
      %s18 = sshll.u32 %s0, 4
      %s19 = int_to_ptr.hbm [resolvable:$true] %s18
      %21 = dma.hbm_to_smem %s19, 32, [#allocation2], [#allocation5]
    $region5: #{tpu_custom_call.1} parent=1 // pred_fallthru
      _
    // Predicated region
    $region6: #{tpu_custom_call.1} parent=1 // pred_check
      _
    $region7: #{tpu_custom_call.1} parent=1 // pred_check_branch
      %23 = sbr.rel (0) target = $region9
    $region8: #{tpu_custom_call.1} parent=1 // pred_region
      %25 = vsyncadd [#allocation3], 0
      %s27 = sshll.u32 %s1, 4
      %s28 = int_to_ptr.hbm [resolvable:$true] %s27
      %s29 = sshll.u32 [#allocation6], 4
      %s30 = int_to_ptr.vmem [resolvable:$true] %s29
      %32 = dma.hbm_to_vmem [thread:$0]  %s28, 32, %s30, [#allocation3]
    $region9: #{tpu_custom_call.1} parent=1 // pred_fallthru
      _
    // Predicated region
    $region10: #{tpu_custom_call.1} parent=1 // pred_check
      _
    $region11: #{tpu_custom_call.1} parent=1 // pred_check_branch
      %34 = sbr.rel (0) target = $region13
    $region12: #{tpu_custom_call.1} parent=1 // pred_region
      %36 = vsyncadd [#allocation8], 0
      %s38 = sshll.u32 %s2, 4
      %s39 = int_to_ptr.hbm [resolvable:$true] %s38
      %s40 = sshll.u32 [#allocation7], 4
      %s41 = int_to_ptr.vmem [resolvable:$true] %s40
      %43 = dma.hbm_to_vmem [thread:$0]  %s39, 32, %s41, [#allocation8]
    $region13: #{tpu_custom_call.1} parent=1 // pred_fallthru
      _
    // Predicated region
    $region14: #{tpu_custom_call.1} parent=1 // pred_check
      _
    $region15: #{tpu_custom_call.1} parent=1 // pred_check_branch
      %45 = sbr.rel (0) target = $region17
    $region16: #{tpu_custom_call.1} parent=1 // pred_region
      _
    $region17: #{tpu_custom_call.1} parent=1 // pred_fallthru
      _
    // Predicated region
    $region18: #{tpu_custom_call.1} parent=1 // pred_check
      _
    $region19: #{tpu_custom_call.1} parent=1 // pred_check_branch
      %47 = sbr.rel (0) target = $region21
    $region20: #{tpu_custom_call.1} parent=1 // pred_region
      %49 = dma.done [#allocation5], 32
    $region21: #{tpu_custom_call.1} parent=1 // pred_fallthru
      _
    // Predicated region
    $region22: #{tpu_custom_call.1} parent=1 // pred_check
      _
    $region23: #{tpu_custom_call.1} parent=1 // pred_check_branch
      %51 = sbr.rel (0) target = $region25
    $region24: #{tpu_custom_call.1} parent=1 // pred_region
      %53 = dma.done [#allocation3], 32
    $region25: #{tpu_custom_call.1} parent=1 // pred_fallthru
      _
    // Predicated region
    $region26: #{tpu_custom_call.1} parent=1 // pred_check
      _
    $region27: #{tpu_custom_call.1} parent=1 // pred_check_branch
      %55 = sbr.rel (0) target = $region29
    $region28: #{tpu_custom_call.1} parent=1 // pred_region
      %57 = dma.done [#allocation8], 32
    $region29: #{tpu_custom_call.1} parent=1 // pred_fallthru
      _
    %58 = sfence
    %v59 = vld [vmem:[#allocation6] sm:$0x3]
    %v60 = vld [vmem:[#allocation7] sm:$0x3]
    %v61 = vld [vmem:[%s3] sm:$0x3]
    %s62 = sld [smem:[#allocation2]]
    %v63 = vstv %s62
    %v64 = vmul.f32 %v63, %v59
    %s65 = sld [smem:[#allocation2 + $0x80]]
    %v66 = vstv %s65
    %v67 = vmul.f32 %v66, %v59
    %v69 = vrot.slane %v67, 1
    %v71 = vadd.f32 %v64, %v69
    %v72 = vmul.f32 %v60, %v71
    %v73 = vmul.f32 %v72, %v61
    %v74 = vadd.f32 %v73, 0.0
    %s75 = sld [smem:[#allocation2 + $0x1]]
    %v76 = vstv %s75
    %v77 = vmul.f32 %v76, %v59
    %s78 = sld [smem:[#allocation2 + $0x81]]
    %v79 = vstv %s78
    %v80 = vmul.f32 %v79, %v59
    %v82 = vrot.slane %v80, 1
    %v84 = vadd.f32 %v77, %v82
    %v85 = vmul.f32 %v60, %v84
    %v87 = vrot.slane %v61, 1
    %v89 = vmul.f32 %v85, %v87
    %v90 = vadd.f32 %v74, %v89
    %s91 = sld [smem:[#allocation2 + $0x2]]
    %v92 = vstv %s91
    %v93 = vmul.f32 %v92, %v59
    %s94 = sld [smem:[#allocation2 + $0x82]]
    %v95 = vstv %s94
    %v96 = vmul.f32 %v95, %v59
    %v98 = vrot.slane %v96, 1
    %v100 = vadd.f32 %v93, %v98
    %v102 = vrot.slane %v100, 7
    %v104 = vmul.f32 %v60, %v102
    %v105 = vrot.slane %v61, 7
    %v107 = vmul.f32 %v104, %v105
    %v109 = vrot.slane %v107, 1
    %v111 = vadd.f32 %v90, %v109
    %s112 = sld [smem:[#allocation2 + $0x3]]
    %v113 = vstv %s112
    %v114 = vmul.f32 %v113, %v59
    %s115 = sld [smem:[#allocation2 + $0x83]]
    %v116 = vstv %s115
    %v117 = vmul.f32 %v116, %v59
    %v119 = vrot.slane %v117, 1
    %v121 = vadd.f32 %v114, %v119
    %v123 = vrot.slane %v121, 7
    %v125 = vmul.f32 %v60, %v123
    %v126 = vmul.f32 %v125, %v61
    %v128 = vrot.slane %v126, 1
    %v130 = vadd.f32 %v111, %v128
    %131 = vst [vmem:[#allocation9] sm:$0x1] %v130
    // Predicated region
    $region30: #{tpu_custom_call.1} parent=1 // pred_check
      _
    $region31: #{tpu_custom_call.1} parent=1 // pred_check_branch
      %133 = sbr.rel (0) target = $region33
    $region32: #{tpu_custom_call.1} parent=1 // pred_region
      %135 = vsyncadd [#allocation4], 0
      %s137 = sshll.u32 [#allocation9], 4
      %s138 = int_to_ptr.vmem [resolvable:$true] %s137
      %s139 = sshll.u32 %s4, 4
      %s140 = int_to_ptr.hbm [resolvable:$true] %s139
      %142 = dma.vmem_to_hbm [thread:$0]  %s138, 16, %s140, [#allocation4]
    $region33: #{tpu_custom_call.1} parent=1 // pred_fallthru
      _
    // Predicated region
    $region34: #{tpu_custom_call.1} parent=1 // pred_check
      _
    $region35: #{tpu_custom_call.1} parent=1 // pred_check_branch
      %144 = sbr.rel (0) target = $region37
    $region36: #{tpu_custom_call.1} parent=1 // pred_region
      %146 = dma.done [#allocation4], 16
    $region37: #{tpu_custom_call.1} parent=1 // pred_fallthru
      _
    %147 = vsyncpa [#allocation3], 1
    %148 = vsyncpa [#allocation8], 1
    %149 = vsyncpa [#allocation4], 1
    %150 = vsyncpa [#allocation5], 1

</llo_original>
